<compile_context>
chip_gen: v6e
topology: v6e:2x2x1
jax: 0.10.0
libtpu: 0.0.40
codegen_flags: <defaults>
</compile_context>

<pallas_src>
import functools

import numpy as np
import jax
import jax.numpy as jnp
from jax.experimental import pallas as pl
from jax.experimental.pallas import tpu as pltpu

EPS = 1e-20

# deterministic positive 3x3 stencil (sums to 1) for the surrogate stages
_W3 = np.array([[1., 2., 1.],
                [2., 4., 2.],
                [1., 2., 1.]], dtype=np.float32)
_W3 = _W3 / _W3.sum()


# ----------------------------------------------------------------------------
# fused NC2 forward kernel (mask -> stage1 -> cd update -> stage2)
# operates on lane-dense (N*C, H*W) f32 planes, everything stays in VMEM
# ----------------------------------------------------------------------------
def _nc2_kernel(*refs, nc, w_lanes, hw, has_cd):
    if has_cd:
        (wp_ref, d_ref, cd_ref, ml_ref, mr_ref, mt_ref, mb_ref,
         dout_ref, cdout_ref) = refs
    else:
        (wp_ref, d_ref, ml_ref, mr_ref, mt_ref, mb_ref,
         dout_ref, cdout_ref) = refs

    d = d_ref[...]                                   # (NC, HW) f32
    ml = ml_ref[...]                                 # (1, HW) 0/1 border masks
    mr = mr_ref[...]
    mt = mt_ref[...]
    mb = mb_ref[...]

    def recip(x):
        # EUP approximate reciprocal + one Newton step (~f32 accuracy).
        r = pl.reciprocal(x, approx=True)
        return r * (2.0 - x * r)

    def conv16(x):
        # Un-normalized separable [1,2,1] x [1,2,1] zero-padded stencil
        # (== 16 * normalized 3x3 conv).  Lane rolls run on the XLU slot;
        # border wrap-around is killed by the precomputed 0/1 masks.
        hx = (x + x
              + pltpu.roll(x, 1, axis=1) * ml              # x[k-1]
              + pltpu.roll(x, hw - 1, axis=1) * mr)        # x[k+1]
        return (hx + hx
                + pltpu.roll(hx, w_lanes, axis=1) * mt     # x[k-W]
                + pltpu.roll(hx, hw - w_lanes, axis=1) * mb)  # x[k+W]

    def stage(cc):
        # Normalized-conv surrogate with the den/num planes stacked on the
        # sublane axis so ONE conv16 serves both -> 4 rolls per stage.
        op = jnp.concatenate([cc, d * cc], axis=0)          # (2*NC, HW)
        c = conv16(op)
        return c[nc:, :], c[:nc, :]                         # num*16, den*16

    # confidence input:  cd = (d > 0).float()  if not provided
    if has_cd:
        cd = cd_ref[...]
    else:
        cd = (d > 0.0).astype(jnp.float32)

    wp = wp_ref[0]                                   # softplus(w_pow_d) scalar

    # ---- stage1 (frozen surrogate): d1 = conv(d*cd)/conv(cd) ----
    num1, den1 = stage(cd)
    d1 = num1 * recip(den1 + 16.0 * EPS)             # eps folded with x16 scale

    # ---- cd = cd * clamp_max(d1 / (d + eps), 1) ** softplus(w_pow_d) ----
    ratio = jnp.minimum(d1 * recip(d + EPS), 1.0)
    powed = jnp.where(ratio > 0.0,
                      jnp.exp(wp * jnp.log(jnp.maximum(ratio, 1e-30))),
                      0.0)                           # 0**w = 0 (w > 0)
    cd = cd * powed

    # ---- stage2 (surrogate) ----
    num2, den2 = stage(cd)
    dout_ref[...] = num2 * recip(den2 + 16.0 * EPS)
    cdout_ref[...] = den2 * (1.0 / 16.0)             # single deferred 1/16


def _make_forward(has_cd):
    def fwd(w_raw, d, *maybe_cd):
        N, C, H, W = d.shape
        NC, HW = N * C, H * W          # best layout when NC % 8 == 0, HW % 128 == 0

        wp = jax.nn.softplus(w_raw).reshape(1).astype(jnp.float32)
        d2 = d.reshape(NC, HW).astype(jnp.float32)

        # compile-time border masks for the row-major flattened k = h*W + w layout
        k = np.arange(HW)
        wi, hi = k % W, k // W
        def m(b):
            return jnp.asarray(b.astype(np.float32)).reshape(1, HW)
        ml, mr = m(wi > 0), m(wi < W - 1)
        mt, mb = m(hi > 0), m(hi < H - 1)

        args = [wp, d2]
        in_specs = [pl.BlockSpec(memory_space=pltpu.MemorySpace.SMEM),
                    pl.BlockSpec((NC, HW), lambda i: (0, 0))]
        if has_cd:
            args.append(maybe_cd[0].reshape(NC, HW).astype(jnp.float32))
            in_specs.append(pl.BlockSpec((NC, HW), lambda i: (0, 0)))
        args += [ml, mr, mt, mb]
        in_specs += [pl.BlockSpec((1, HW), lambda i: (0, 0))] * 4

        kern = functools.partial(_nc2_kernel, nc=NC, w_lanes=W, hw=HW,
                                 has_cd=has_cd)
        d_out, cd_out = pl.pallas_call(
            kern,
            out_shape=(jax.ShapeDtypeStruct((NC, HW), jnp.float32),
                       jax.ShapeDtypeStruct((NC, HW), jnp.float32)),
            grid=(1,),
            in_specs=in_specs,
            out_specs=(pl.BlockSpec((NC, HW), lambda i: (0, 0)),
                       pl.BlockSpec((NC, HW), lambda i: (0, 0))),
            compiler_params=pltpu.CompilerParams(
                dimension_semantics=("arbitrary",)),
        )(*args)
        return {'d': d_out.reshape(N, C, H, W),
                'cd': cd_out.reshape(N, C, H, W)}
    return jax.jit(fwd)


_FWD_NOCD = _make_forward(has_cd=False)
_FWD_CD = _make_forward(has_cd=True)


# ----------------------------------------------------------------------------
# NC2 module (forward pass)
# ----------------------------------------------------------------------------
class NC2Pallas:
    def __init__(self, key):
        # torch.rand((1,1,1,1)) equivalent, deterministic
        self.w_pow_d = jax.random.uniform(key, (1, 1, 1, 1), jnp.float32)
        self.eps = EPS

    def prepare_weights(self):
        return (jax.nn.softplus(self.w_pow_d),)

    def __call__(self, d, cd=None):
        if cd is None:
            return _FWD_NOCD(self.w_pow_d, d)
        return _FWD_CD(self.w_pow_d, d, cd)


# ----------------------------------------------------------------------------
# pure-JAX reference (same math) for a sanity check
# ----------------------------------------------------------------------------
def _ref_stage(d, cd):
    N, C, H, W = d.shape
    dp = jnp.pad(d.reshape(N * C, H, W), ((0, 0), (1, 1), (1, 1)))
    cp = jnp.pad(cd.reshape(N * C, H, W), ((0, 0), (1, 1), (1, 1)))
    num = jnp.zeros((N * C, H, W), jnp.float32)
    den = jnp.zeros((N * C, H, W), jnp.float32)
    for i in range(3):
        for j in range(3):
            w = float(_W3[i, j])
            num = num + w * dp[:, i:i + H, j:j + W] * cp[:, i:i + H, j:j + W]
            den = den + w * cp[:, i:i + H, j:j + W]
    return {'d': (num / (den + EPS)).reshape(N, C, H, W),
            'cd': den.reshape(N, C, H, W)}


def _ref_forward(d, w_pow_d_raw, cd=None):
    w = jax.nn.softplus(w_pow_d_raw)
    if cd is None:
        cd = (d > 0).astype(jnp.float32)
    o1 = _ref_stage(d, cd)
    ratio = jnp.minimum(o1['d'] / (d + EPS), 1.0)
    cd = cd * jnp.power(ratio, w)
    return _ref_stage(d, cd)


if __name__ == "__main__":
    key = jax.random.PRNGKey(0)
    k_param, k_depth, k_mask = jax.random.split(key, 3)

    # sparse depth map, NCHW = (2, 4, 16, 16) -> N*C = 8 (full sublane tile)
    N, C, H, W = 2, 4, 16, 16
    depth = jax.random.uniform(k_depth, (N, C, H, W), jnp.float32, 0.1, 10.0)
    mask = jax.random.bernoulli(k_mask, 0.3, (N, C, H, W))
    d = jnp.where(mask, depth, 0.0).astype(jnp.float32)

    model = NC2Pallas(k_param)

    # cd=None path (module default)
    outs2 = model(d)
    jax.block_until_ready(outs2['d'])
    jax.block_until_ready(outs2['cd'])
    ref = _ref_forward(d, model.w_pow_d)
    np.testing.assert_allclose(np.asarray(outs2['d']), np.asarray(ref['d']),
                               rtol=1e-4, atol=1e-4)
    np.testing.assert_allclose(np.asarray(outs2['cd']), np.asarray(ref['cd']),
                               rtol=1e-4, atol=1e-4)

    # explicit-cd path
    cd0 = (d > 0).astype(jnp.float32)
    outs2b = model(d, cd0)
    jax.block_until_ready(outs2b['d'])
    refb = _ref_forward(d, model.w_pow_d, cd0)
    np.testing.assert_allclose(np.asarray(outs2b['d']), np.asarray(refb['d']),
                               rtol=1e-4, atol=1e-4)
    np.testing.assert_allclose(np.asarray(outs2b['cd']), np.asarray(refb['cd']),
                               rtol=1e-4, atol=1e-4)

    print("KERNEL_OK")
</pallas_src>

<mosaic_0001>
module attributes {stable_mosaic.version = 11 : i64} {
  func.func @_nc2_kernel(%arg0: i32, %arg1: memref<1xf32, #tpu.memory_space<smem>>, %arg2: memref<8x256xf32, #tpu.memory_space<vmem>>, %arg3: memref<1x256xf32, #tpu.memory_space<vmem>>, %arg4: memref<1x256xf32, #tpu.memory_space<vmem>>, %arg5: memref<1x256xf32, #tpu.memory_space<vmem>>, %arg6: memref<1x256xf32, #tpu.memory_space<vmem>>, %arg7: memref<8x256xf32, #tpu.memory_space<vmem>>, %arg8: memref<8x256xf32, #tpu.memory_space<vmem>>) attributes {dimension_semantics = [#tpu.dimension_semantics<arbitrary>], iteration_bounds = array<i64: 1>, scalar_prefetch = 0 : i64, scratch_operands = 0 : i64, tpu.core_type = #tpu.core_type<tc>, window_params = [{transform_indices = @transform_0, window_bounds = array<i64: 1>}, {pipeline_mode = #tpu.pipeline_mode<synchronous>, transform_indices = @transform_1, window_bounds = array<i64: 8, 256>}, {pipeline_mode = #tpu.pipeline_mode<synchronous>, transform_indices = @transform_2, window_bounds = array<i64: 1, 256>}, {pipeline_mode = #tpu.pipeline_mode<synchronous>, transform_indices = @transform_3, window_bounds = array<i64: 1, 256>}, {pipeline_mode = #tpu.pipeline_mode<synchronous>, transform_indices = @transform_4, window_bounds = array<i64: 1, 256>}, {pipeline_mode = #tpu.pipeline_mode<synchronous>, transform_indices = @transform_5, window_bounds = array<i64: 1, 256>}, {pipeline_mode = #tpu.pipeline_mode<synchronous>, transform_indices = @transform_6, window_bounds = array<i64: 8, 256>}, {pipeline_mode = #tpu.pipeline_mode<synchronous>, transform_indices = @transform_7, window_bounds = array<i64: 8, 256>}]} {
    %c0 = arith.constant 0 : index
    %c0_0 = arith.constant 0 : index
    %0 = vector.load %arg2[%c0, %c0_0] : memref<8x256xf32, #tpu.memory_space<vmem>>, vector<8x256xf32>
    %c0_1 = arith.constant 0 : index
    %c0_2 = arith.constant 0 : index
    %1 = vector.load %arg3[%c0_1, %c0_2] : memref<1x256xf32, #tpu.memory_space<vmem>>, vector<1x256xf32>
    %c0_3 = arith.constant 0 : index
    %c0_4 = arith.constant 0 : index
    %2 = vector.load %arg4[%c0_3, %c0_4] : memref<1x256xf32, #tpu.memory_space<vmem>>, vector<1x256xf32>
    %c0_5 = arith.constant 0 : index
    %c0_6 = arith.constant 0 : index
    %3 = vector.load %arg5[%c0_5, %c0_6] : memref<1x256xf32, #tpu.memory_space<vmem>>, vector<1x256xf32>
    %c0_7 = arith.constant 0 : index
    %c0_8 = arith.constant 0 : index
    %4 = vector.load %arg6[%c0_7, %c0_8] : memref<1x256xf32, #tpu.memory_space<vmem>>, vector<1x256xf32>
    %cst = arith.constant 0.000000e+00 : f32
    %5 = vector.broadcast %cst : f32 to vector<8x256xf32>
    %6 = arith.cmpf ogt, %0, %5 : vector<8x256xf32>
    %7 = arith.extui %6 : vector<8x256xi1> to vector<8x256xi32>
    %8 = arith.sitofp %7 : vector<8x256xi32> to vector<8x256xf32>
    %c0_9 = arith.constant 0 : index
    %9 = memref.load %arg1[%c0_9] : memref<1xf32, #tpu.memory_space<smem>>
    %10 = arith.mulf %0, %8 : vector<8x256xf32>
    %11 = tpu.concatenate %8, %10 in 0 : vector<8x256xf32>, vector<8x256xf32> -> vector<16x256xf32>
    %12 = arith.addf %11, %11 : vector<16x256xf32>
    %c1_i32 = arith.constant 1 : i32
    %13 = tpu.dynamic_rotate %11 by %c1_i32 dim 1 : vector<16x256xf32>, i32 -> vector<16x256xf32>
    %14 = vector.broadcast %1 : vector<1x256xf32> to vector<16x256xf32>
    %15 = arith.mulf %13, %14 : vector<16x256xf32>
    %16 = arith.addf %12, %15 : vector<16x256xf32>
    %c255_i32 = arith.constant 255 : i32
    %17 = tpu.dynamic_rotate %11 by %c255_i32 dim 1 : vector<16x256xf32>, i32 -> vector<16x256xf32>
    %18 = vector.broadcast %2 : vector<1x256xf32> to vector<16x256xf32>
    %19 = arith.mulf %17, %18 : vector<16x256xf32>
    %20 = arith.addf %16, %19 : vector<16x256xf32>
    %21 = arith.addf %20, %20 : vector<16x256xf32>
    %c16_i32 = arith.constant 16 : i32
    %22 = tpu.dynamic_rotate %20 by %c16_i32 dim 1 : vector<16x256xf32>, i32 -> vector<16x256xf32>
    %23 = vector.broadcast %3 : vector<1x256xf32> to vector<16x256xf32>
    %24 = arith.mulf %22, %23 : vector<16x256xf32>
    %25 = arith.addf %21, %24 : vector<16x256xf32>
    %c240_i32 = arith.constant 240 : i32
    %26 = tpu.dynamic_rotate %20 by %c240_i32 dim 1 : vector<16x256xf32>, i32 -> vector<16x256xf32>
    %27 = vector.broadcast %4 : vector<1x256xf32> to vector<16x256xf32>
    %28 = arith.mulf %26, %27 : vector<16x256xf32>
    %29 = arith.addf %25, %28 : vector<16x256xf32>
    %30 = vector.extract_strided_slice %29 {offsets = [8, 0], sizes = [8, 256], strides = [1, 1]} : vector<16x256xf32> to vector<8x256xf32>
    %31 = vector.extract_strided_slice %29 {offsets = [0, 0], sizes = [8, 256], strides = [1, 1]} : vector<16x256xf32> to vector<8x256xf32>
    %cst_10 = arith.constant 1.600000e-19 : f32
    %32 = vector.broadcast %cst_10 : f32 to vector<8x256xf32>
    %33 = arith.addf %31, %32 : vector<8x256xf32>
    %34 = tpu.reciprocal %33 {approx = true} : vector<8x256xf32> -> vector<8x256xf32>
    %35 = arith.mulf %33, %34 : vector<8x256xf32>
    %cst_11 = arith.constant 2.000000e+00 : f32
    %36 = vector.broadcast %cst_11 : f32 to vector<8x256xf32>
    %37 = arith.subf %36, %35 : vector<8x256xf32>
    %38 = arith.mulf %34, %37 : vector<8x256xf32>
    %39 = arith.mulf %30, %38 : vector<8x256xf32>
    %cst_12 = arith.constant 9.99999968E-21 : f32
    %40 = vector.broadcast %cst_12 : f32 to vector<8x256xf32>
    %41 = arith.addf %0, %40 : vector<8x256xf32>
    %42 = tpu.reciprocal %41 {approx = true} : vector<8x256xf32> -> vector<8x256xf32>
    %43 = arith.mulf %41, %42 : vector<8x256xf32>
    %cst_13 = arith.constant 2.000000e+00 : f32
    %44 = vector.broadcast %cst_13 : f32 to vector<8x256xf32>
    %45 = arith.subf %44, %43 : vector<8x256xf32>
    %46 = arith.mulf %42, %45 : vector<8x256xf32>
    %47 = arith.mulf %39, %46 : vector<8x256xf32>
    %cst_14 = arith.constant 1.000000e+00 : f32
    %48 = vector.broadcast %cst_14 : f32 to vector<8x256xf32>
    %49 = arith.minimumf %47, %48 : vector<8x256xf32>
    %cst_15 = arith.constant 0.000000e+00 : f32
    %50 = vector.broadcast %cst_15 : f32 to vector<8x256xf32>
    %51 = arith.cmpf ogt, %49, %50 : vector<8x256xf32>
    %cst_16 = arith.constant 1.000000e-30 : f32
    %52 = vector.broadcast %cst_16 : f32 to vector<8x256xf32>
    %53 = arith.maximumf %49, %52 : vector<8x256xf32>
    %54 = math.log %53 : vector<8x256xf32>
    %55 = vector.broadcast %9 : f32 to vector<8x256xf32>
    %56 = arith.mulf %55, %54 : vector<8x256xf32>
    %57 = math.exp %56 : vector<8x256xf32>
    %cst_17 = arith.constant 0.000000e+00 : f32
    %58 = vector.broadcast %cst_17 : f32 to vector<8x256xf32>
    %59 = arith.select %51, %57, %58 : vector<8x256xi1>, vector<8x256xf32>
    %60 = arith.mulf %8, %59 : vector<8x256xf32>
    %61 = arith.mulf %0, %60 : vector<8x256xf32>
    %62 = tpu.concatenate %60, %61 in 0 : vector<8x256xf32>, vector<8x256xf32> -> vector<16x256xf32>
    %63 = arith.addf %62, %62 : vector<16x256xf32>
    %c1_i32_18 = arith.constant 1 : i32
    %64 = tpu.dynamic_rotate %62 by %c1_i32_18 dim 1 : vector<16x256xf32>, i32 -> vector<16x256xf32>
    %65 = vector.broadcast %1 : vector<1x256xf32> to vector<16x256xf32>
    %66 = arith.mulf %64, %65 : vector<16x256xf32>
    %67 = arith.addf %63, %66 : vector<16x256xf32>
    %c255_i32_19 = arith.constant 255 : i32
    %68 = tpu.dynamic_rotate %62 by %c255_i32_19 dim 1 : vector<16x256xf32>, i32 -> vector<16x256xf32>
    %69 = vector.broadcast %2 : vector<1x256xf32> to vector<16x256xf32>
    %70 = arith.mulf %68, %69 : vector<16x256xf32>
    %71 = arith.addf %67, %70 : vector<16x256xf32>
    %72 = arith.addf %71, %71 : vector<16x256xf32>
    %c16_i32_20 = arith.constant 16 : i32
    %73 = tpu.dynamic_rotate %71 by %c16_i32_20 dim 1 : vector<16x256xf32>, i32 -> vector<16x256xf32>
    %74 = vector.broadcast %3 : vector<1x256xf32> to vector<16x256xf32>
    %75 = arith.mulf %73, %74 : vector<16x256xf32>
    %76 = arith.addf %72, %75 : vector<16x256xf32>
    %c240_i32_21 = arith.constant 240 : i32
    %77 = tpu.dynamic_rotate %71 by %c240_i32_21 dim 1 : vector<16x256xf32>, i32 -> vector<16x256xf32>
    %78 = vector.broadcast %4 : vector<1x256xf32> to vector<16x256xf32>
    %79 = arith.mulf %77, %78 : vector<16x256xf32>
    %80 = arith.addf %76, %79 : vector<16x256xf32>
    %81 = vector.extract_strided_slice %80 {offsets = [8, 0], sizes = [8, 256], strides = [1, 1]} : vector<16x256xf32> to vector<8x256xf32>
    %82 = vector.extract_strided_slice %80 {offsets = [0, 0], sizes = [8, 256], strides = [1, 1]} : vector<16x256xf32> to vector<8x256xf32>
    %cst_22 = arith.constant 1.600000e-19 : f32
    %83 = vector.broadcast %cst_22 : f32 to vector<8x256xf32>
    %84 = arith.addf %82, %83 : vector<8x256xf32>
    %85 = tpu.reciprocal %84 {approx = true} : vector<8x256xf32> -> vector<8x256xf32>
    %86 = arith.mulf %84, %85 : vector<8x256xf32>
    %cst_23 = arith.constant 2.000000e+00 : f32
    %87 = vector.broadcast %cst_23 : f32 to vector<8x256xf32>
    %88 = arith.subf %87, %86 : vector<8x256xf32>
    %89 = arith.mulf %85, %88 : vector<8x256xf32>
    %90 = arith.mulf %81, %89 : vector<8x256xf32>
    %c0_24 = arith.constant 0 : index
    %c0_25 = arith.constant 0 : index
    %91 = vector.load %arg7[%c0_24, %c0_25] : memref<8x256xf32, #tpu.memory_space<vmem>>, vector<8x256xf32>
    tpu.vector_store %arg7[%c0_24, %c0_25], %90 {strides = array<i32>} : memref<8x256xf32, #tpu.memory_space<vmem>>, vector<8x256xf32>,
    %cst_26 = arith.constant 6.250000e-02 : f32
    %92 = vector.broadcast %cst_26 : f32 to vector<8x256xf32>
    %93 = arith.mulf %82, %92 : vector<8x256xf32>
    %c0_27 = arith.constant 0 : index
    %c0_28 = arith.constant 0 : index
    %94 = vector.load %arg8[%c0_27, %c0_28] : memref<8x256xf32, #tpu.memory_space<vmem>>, vector<8x256xf32>
    tpu.vector_store %arg8[%c0_27, %c0_28], %93 {strides = array<i32>} : memref<8x256xf32, #tpu.memory_space<vmem>>, vector<8x256xf32>,
    return
  }
  func.func @transform_0(%arg0: i32) -> i32 {
    %c0_i32 = arith.constant 0 : i32
    %c0_i32_0 = arith.constant 0 : i32
    return %c0_i32 : i32
  }
  func.func @transform_1(%arg0: i32) -> (i32, i32) {
    %c0_i32 = arith.constant 0 : i32
    %c0_i32_0 = arith.constant 0 : i32
    %c0_i32_1 = arith.constant 0 : i32
    return %c0_i32, %c0_i32_0 : i32, i32
  }
  func.func @transform_2(%arg0: i32) -> (i32, i32) {
    %c0_i32 = arith.constant 0 : i32
    %c0_i32_0 = arith.constant 0 : i32
    %c0_i32_1 = arith.constant 0 : i32
    return %c0_i32, %c0_i32_0 : i32, i32
  }
  func.func @transform_3(%arg0: i32) -> (i32, i32) {
    %c0_i32 = arith.constant 0 : i32
    %c0_i32_0 = arith.constant 0 : i32
    %c0_i32_1 = arith.constant 0 : i32
    return %c0_i32, %c0_i32_0 : i32, i32
  }
  func.func @transform_4(%arg0: i32) -> (i32, i32) {
    %c0_i32 = arith.constant 0 : i32
    %c0_i32_0 = arith.constant 0 : i32
    %c0_i32_1 = arith.constant 0 : i32
    return %c0_i32, %c0_i32_0 : i32, i32
  }
  func.func @transform_5(%arg0: i32) -> (i32, i32) {
    %c0_i32 = arith.constant 0 : i32
    %c0_i32_0 = arith.constant 0 : i32
    %c0_i32_1 = arith.constant 0 : i32
    return %c0_i32, %c0_i32_0 : i32, i32
  }
  func.func @transform_6(%arg0: i32) -> (i32, i32) {
    %c0_i32 = arith.constant 0 : i32
    %c0_i32_0 = arith.constant 0 : i32
    %c0_i32_1 = arith.constant 0 : i32
    return %c0_i32, %c0_i32_0 : i32, i32
  }
  func.func @transform_7(%arg0: i32) -> (i32, i32) {
    %c0_i32 = arith.constant 0 : i32
    %c0_i32_0 = arith.constant 0 : i32
    %c0_i32_1 = arith.constant 0 : i32
    return %c0_i32, %c0_i32_0 : i32, i32
  }
}

</mosaic_0001>

<llo_original>
// kernel: fwd.1
$region0: #{fwd.1}
  #allocation0 [shape = 'u32[]', space=smem, size = 0x4, offset = 0x4, fixed_abs, tag = 'smem constant byte address 0x4 - core index']
  #allocation1 [shape = 'u32[144,128]{1,0:T(1,128)}', space=vmem, size = 0x12000, scoped, tag = 'internal scratch']
  #allocation2 [shape = 'f32[1]{0:T(128)S(6)}', space=smem, size = 0x200, scoped, tag = 'scoped memory for fwd.1']
  %s0 = inlined_call_operand.<no memory space> [shape: f32[1], index: 0, kind: input, shape index: {}]
  %s1 = inlined_call_operand.vmem [shape: f32[8,256], index: 1, kind: input, shape index: {}]
  %s2 = inlined_call_operand.vmem [shape: f32[1,256], index: 2, kind: input, shape index: {}]
  %s3 = inlined_call_operand.vmem [shape: f32[1,256], index: 3, kind: input, shape index: {}]
  %s4 = inlined_call_operand.vmem [shape: f32[1,256], index: 4, kind: input, shape index: {}]
  %s5 = inlined_call_operand.vmem [shape: f32[1,256], index: 5, kind: input, shape index: {}]
  %s6 = inlined_call_operand.vmem [shape: f32[8,256], index: 6, kind: output, shape index: {0}]
  %s7 = inlined_call_operand.vmem [shape: f32[8,256], index: 7, kind: output, shape index: {1}]
  %8 = xla_tuple %s6, %s7
  %s9 = sld [smem:[#allocation0]]
  $region42: #{fwd.1} parent=0
    _
  %s11 = ssub.s32 1, %s9
  %s12 = scalar_select 0, %s11, %s9
  %13 = sst [smem:[#allocation2]] %s0
  // Predicated region
  $region2: #{fwd.1} parent=0 // pred_check
    _
  $region3: #{fwd.1} parent=0 // pred_check_branch
    %15 = sbr.rel (0) target = $region5
  $region4: #{fwd.1} parent=0 // pred_region
    _
  $region5: #{fwd.1} parent=0 // pred_fallthru
    _
  // Predicated region
  $region6: #{fwd.1} parent=0 // pred_check
    _
  $region7: #{fwd.1} parent=0 // pred_check_branch
    %17 = sbr.rel (0) target = $region9
  $region8: #{fwd.1} parent=0 // pred_region
    _
  $region9: #{fwd.1} parent=0 // pred_fallthru
    _
  // Predicated region
  $region10: #{fwd.1} parent=0 // pred_check
    _
  $region11: #{fwd.1} parent=0 // pred_check_branch
    %19 = sbr.rel (0) target = $region13
  $region12: #{fwd.1} parent=0 // pred_region
    _
  $region13: #{fwd.1} parent=0 // pred_fallthru
    _
  // Predicated region
  $region14: #{fwd.1} parent=0 // pred_check
    _
  $region15: #{fwd.1} parent=0 // pred_check_branch
    %21 = sbr.rel (0) target = $region17
  $region16: #{fwd.1} parent=0 // pred_region
    _
  $region17: #{fwd.1} parent=0 // pred_fallthru
    _
  // Predicated region
  $region18: #{fwd.1} parent=0 // pred_check
    _
  $region19: #{fwd.1} parent=0 // pred_check_branch
    %23 = sbr.rel (0) target = $region21
  $region20: #{fwd.1} parent=0 // pred_region
    _
  $region21: #{fwd.1} parent=0 // pred_fallthru
    _
  // Predicated region
  $region22: #{fwd.1} parent=0 // pred_check
    _
  $region23: #{fwd.1} parent=0 // pred_check_branch
    %25 = sbr.rel (0) target = $region25
  $region24: #{fwd.1} parent=0 // pred_region
    _
  $region25: #{fwd.1} parent=0 // pred_fallthru
    _
  %v26 = vld [vmem:[%s1] sm:$0xff]
  %v27 = vld [vmem:[%s1 + $0x8] sm:$0xff]
  %v28 = vld [vmem:[%s2] sm:$0x3]
  %v29 = vld [vmem:[%s3] sm:$0x3]
  %v30 = vld [vmem:[%s4] sm:$0x3]
  %v31 = vld [vmem:[%s5] sm:$0x3]
  %vm32 = vcmp.gt.f32.partialorder %v26, 0.0
  %vm33 = vcmp.gt.f32.partialorder %v27, 0.0
  %v34 = vsel %vm32, 1, 0
  %v35 = vsel %vm33, 1, 0
  %v36 = vcvt.s32.f32 %v34
  %v37 = vcvt.s32.f32 %v35
  %s38 = sld [smem:[#allocation2]]
  %v39 = vmul.f32 %v26, %v36
  %v40 = vmul.f32 %v27, %v37
  %v41 = vadd.f32 %v36, %v36
  %v42 = vadd.f32 %v37, %v37
  %v43 = vadd.f32 %v39, %v39
  %v44 = vadd.f32 %v40, %v40
  %45 = vrot.lane.b32.xlu0 %v36, 1
  %v46 = vpop.permute.xlu0 %45
  %47 = vrot.lane.b32.xlu0 %v39, 1
  %v48 = vpop.permute.xlu0 %47
  %49 = vrot.lane.b32.xlu0 %v37, 1
  %v50 = vpop.permute.xlu0 %49
  %51 = vrot.lane.b32.xlu0 %v40, 1
  %v52 = vpop.permute.xlu0 %51
  %v53 = vlaneseq
  %v54 = vand.u32 %v53, 127
  %vm55 = vcmp.lt.s32.totalorder %v54, 1
  %v56 = vsel %vm55, %v46, %v50
  %v57 = vsel %vm55, %v48, %v52
  %v58 = vsel %vm55, %v50, %v46
  %v59 = vsel %vm55, %v52, %v48
  %v61 = vlaneseq
  %v62 = vshrl.u32 %v61, 7
  %v63 = vsub.s32 0, %v62
  %v64 = vrot.slane %v28, %v63
  %v65 = vlaneseq
  %v66 = vshrl.u32 %v65, 7
  %v67 = vsub.s32 1, %v66
  %v68 = vrot.slane %v28, %v67
  %v71 = vmul.f32 %v58, %v64
  %v72 = vmul.f32 %v56, %v68
  %v73 = vmul.f32 %v59, %v64
  %v74 = vmul.f32 %v57, %v68
  %v75 = vadd.f32 %v41, %v71
  %v76 = vadd.f32 %v42, %v72
  %v77 = vadd.f32 %v43, %v73
  %v78 = vadd.f32 %v44, %v74
  %79 = vrot.lane.b32.xlu0 %v36, 127
  %v80 = vpop.permute.xlu0 %79
  %81 = vrot.lane.b32.xlu0 %v39, 127
  %v82 = vpop.permute.xlu0 %81
  %83 = vrot.lane.b32.xlu0 %v37, 127
  %v84 = vpop.permute.xlu0 %83
  %85 = vrot.lane.b32.xlu0 %v40, 127
  %v86 = vpop.permute.xlu0 %85
  %vm87 = vcmp.lt.s32.totalorder %v54, 127
  %v88 = vsel %vm87, %v80, %v84
  %v89 = vsel %vm87, %v82, %v86
  %v90 = vsel %vm87, %v84, %v80
  %v91 = vsel %vm87, %v86, %v82
  %v93 = vlaneseq
  %v94 = vshrl.u32 %v93, 7
  %v95 = vsub.s32 0, %v94
  %v96 = vrot.slane %v29, %v95
  %v97 = vlaneseq
  %v98 = vshrl.u32 %v97, 7
  %v99 = vsub.s32 1, %v98
  %v100 = vrot.slane %v29, %v99
  %v103 = vmul.f32 %v88, %v96
  %v104 = vmul.f32 %v90, %v100
  %v105 = vmul.f32 %v89, %v96
  %v106 = vmul.f32 %v91, %v100
  %v107 = vadd.f32 %v75, %v103
  %v108 = vadd.f32 %v76, %v104
  %v109 = vadd.f32 %v77, %v105
  %v110 = vadd.f32 %v78, %v106
  %v111 = vadd.f32 %v107, %v107
  %v112 = vadd.f32 %v108, %v108
  %v113 = vadd.f32 %v109, %v109
  %v114 = vadd.f32 %v110, %v110
  %115 = vrot.lane.b32.xlu0 %v107, 16
  %v116 = vpop.permute.xlu0 %115
  %117 = vrot.lane.b32.xlu0 %v109, 16
  %v118 = vpop.permute.xlu0 %117
  %119 = vrot.lane.b32.xlu0 %v108, 16
  %v120 = vpop.permute.xlu0 %119
  %121 = vrot.lane.b32.xlu0 %v110, 16
  %v122 = vpop.permute.xlu0 %121
  %vm123 = vcmp.lt.s32.totalorder %v54, 16
  %v124 = vsel %vm123, %v116, %v120
  %v125 = vsel %vm123, %v118, %v122
  %v126 = vsel %vm123, %v120, %v116
  %v127 = vsel %vm123, %v122, %v118
  %v129 = vlaneseq
  %v130 = vshrl.u32 %v129, 7
  %v131 = vsub.s32 0, %v130
  %v132 = vrot.slane %v30, %v131
  %v133 = vlaneseq
  %v134 = vshrl.u32 %v133, 7
  %v135 = vsub.s32 1, %v134
  %v136 = vrot.slane %v30, %v135
  %v139 = vmul.f32 %v126, %v132
  %v140 = vmul.f32 %v124, %v136
  %v141 = vmul.f32 %v127, %v132
  %v142 = vmul.f32 %v125, %v136
  %v143 = vadd.f32 %v111, %v139
  %v144 = vadd.f32 %v112, %v140
  %v145 = vadd.f32 %v113, %v141
  %v146 = vadd.f32 %v114, %v142
  %147 = vrot.lane.b32.xlu0 %v107, 112
  %v148 = vpop.permute.xlu0 %147
  %149 = vrot.lane.b32.xlu0 %v109, 112
  %v150 = vpop.permute.xlu0 %149
  %151 = vrot.lane.b32.xlu0 %v108, 112
  %v152 = vpop.permute.xlu0 %151
  %153 = vrot.lane.b32.xlu0 %v110, 112
  %v154 = vpop.permute.xlu0 %153
  %vm155 = vcmp.lt.s32.totalorder %v54, 112
  %v156 = vsel %vm155, %v148, %v152
  %v157 = vsel %vm155, %v150, %v154
  %v158 = vsel %vm155, %v152, %v148
  %v159 = vsel %vm155, %v154, %v150
  %v161 = vlaneseq
  %v162 = vshrl.u32 %v161, 7
  %v163 = vsub.s32 0, %v162
  %v164 = vrot.slane %v31, %v163
  %v165 = vlaneseq
  %v166 = vshrl.u32 %v165, 7
  %v167 = vsub.s32 1, %v166
  %v168 = vrot.slane %v31, %v167
  %v171 = vmul.f32 %v156, %v164
  %v172 = vmul.f32 %v158, %v168
  %v173 = vmul.f32 %v157, %v164
  %v174 = vmul.f32 %v159, %v168
  %v175 = vadd.f32 %v143, %v171
  %v176 = vadd.f32 %v144, %v172
  %v177 = vadd.f32 %v145, %v173
  %v178 = vadd.f32 %v146, %v174
  %v179 = vadd.f32 %v175, 1.6e-19
  %v180 = vadd.f32 %v176, 1.6e-19
  %v181 = vrcp.pop %v179
  %v182 = vrcp.pop %v180
  %v183 = vmul.f32 %v179, %v181
  %v184 = vmul.f32 %v180, %v182
  %v185 = vsub.f32 2.0, %v183
  %v186 = vsub.f32 2.0, %v184
  %v187 = vmul.f32 %v181, %v185
  %v188 = vmul.f32 %v182, %v186
  %v189 = vmul.f32 %v177, %v187
  %v190 = vmul.f32 %v178, %v188
  %v191 = vadd.f32 %v26, 1e-20
  %v192 = vadd.f32 %v27, 1e-20
  %v193 = vrcp.pop %v191
  %v194 = vrcp.pop %v192
  %v195 = vmul.f32 %v191, %v193
  %v196 = vmul.f32 %v192, %v194
  %v197 = vsub.f32 2.0, %v195
  %v198 = vsub.f32 2.0, %v196
  %v199 = vmul.f32 %v193, %v197
  %v200 = vmul.f32 %v194, %v198
  %v201 = vmul.f32 %v189, %v199
  %v202 = vmul.f32 %v190, %v200
  %v203 = vmin.f32 %v201, 1.0
  %v204 = vmin.f32 %v202, 1.0
  %vm205 = vcmp.gt.f32.partialorder %v203, 0.0
  %vm206 = vcmp.gt.f32.partialorder %v204, 0.0
  %v207 = vmax.f32 %v203, 1e-30
  %v208 = vmax.f32 %v204, 1e-30
  %v209 = vlog2.pop %v207
  %v210 = vmul.f32 %v209, 0.6931472
  %v211 = vlog2.pop %v208
  %v212 = vmul.f32 %v211, 0.6931472
  %v213 = vstv %s38
  %v214 = vmul.f32 %v213, %v210
  %v215 = vmul.f32 %v213, %v212
  %v216 = vmul.f32 %v214, 1.442695
  %v217 = vpow.pop %v216
  %v218 = vmul.f32 %v215, 1.442695
  %v219 = vpow.pop %v218
  %v220 = vsel %vm205, %v217, 0.0
  %v221 = vsel %vm206, %v219, 0.0
  %v222 = vmul.f32 %v36, %v220
  %v223 = vmul.f32 %v37, %v221
  %v224 = vmul.f32 %v26, %v222
  %v225 = vmul.f32 %v27, %v223
  %v226 = vadd.f32 %v222, %v222
  %v227 = vadd.f32 %v223, %v223
  %v228 = vadd.f32 %v224, %v224
  %v229 = vadd.f32 %v225, %v225
  %230 = vrot.lane.b32.xlu0 %v222, 1
  %v231 = vpop.permute.xlu0 %230
  %232 = vrot.lane.b32.xlu0 %v224, 1
  %v233 = vpop.permute.xlu0 %232
  %234 = vrot.lane.b32.xlu0 %v223, 1
  %v235 = vpop.permute.xlu0 %234
  %236 = vrot.lane.b32.xlu0 %v225, 1
  %v237 = vpop.permute.xlu0 %236
  %v238 = vsel %vm55, %v231, %v235
  %v239 = vsel %vm55, %v233, %v237
  %v240 = vsel %vm55, %v235, %v231
  %v241 = vsel %vm55, %v237, %v233
  %v242 = vmul.f32 %v240, %v64
  %v243 = vmul.f32 %v238, %v68
  %v244 = vmul.f32 %v241, %v64
  %v245 = vmul.f32 %v239, %v68
  %v246 = vadd.f32 %v226, %v242
  %v247 = vadd.f32 %v227, %v243
  %v248 = vadd.f32 %v228, %v244
  %v249 = vadd.f32 %v229, %v245
  %250 = vrot.lane.b32.xlu0 %v222, 127
  %v251 = vpop.permute.xlu0 %250
  %252 = vrot.lane.b32.xlu0 %v224, 127
  %v253 = vpop.permute.xlu0 %252
  %254 = vrot.lane.b32.xlu0 %v223, 127
  %v255 = vpop.permute.xlu0 %254
  %256 = vrot.lane.b32.xlu0 %v225, 127
  %v257 = vpop.permute.xlu0 %256
  %v258 = vsel %vm87, %v251, %v255
  %v259 = vsel %vm87, %v253, %v257
  %v260 = vsel %vm87, %v255, %v251
  %v261 = vsel %vm87, %v257, %v253
  %v262 = vmul.f32 %v258, %v96
  %v263 = vmul.f32 %v260, %v100
  %v264 = vmul.f32 %v259, %v96
  %v265 = vmul.f32 %v261, %v100
  %v266 = vadd.f32 %v246, %v262
  %v267 = vadd.f32 %v247, %v263
  %v268 = vadd.f32 %v248, %v264
  %v269 = vadd.f32 %v249, %v265
  %v270 = vadd.f32 %v266, %v266
  %v271 = vadd.f32 %v267, %v267
  %v272 = vadd.f32 %v268, %v268
  %v273 = vadd.f32 %v269, %v269
  %274 = vrot.lane.b32.xlu0 %v266, 16
  %v275 = vpop.permute.xlu0 %274
  %276 = vrot.lane.b32.xlu0 %v268, 16
  %v277 = vpop.permute.xlu0 %276
  %278 = vrot.lane.b32.xlu0 %v267, 16
  %v279 = vpop.permute.xlu0 %278
  %280 = vrot.lane.b32.xlu0 %v269, 16
  %v281 = vpop.permute.xlu0 %280
  %v282 = vsel %vm123, %v275, %v279
  %v283 = vsel %vm123, %v277, %v281
  %v284 = vsel %vm123, %v279, %v275
  %v285 = vsel %vm123, %v281, %v277
  %v286 = vmul.f32 %v284, %v132
  %v287 = vmul.f32 %v282, %v136
  %v288 = vmul.f32 %v285, %v132
  %v289 = vmul.f32 %v283, %v136
  %v290 = vadd.f32 %v270, %v286
  %v291 = vadd.f32 %v271, %v287
  %v292 = vadd.f32 %v272, %v288
  %v293 = vadd.f32 %v273, %v289
  %294 = vrot.lane.b32.xlu0 %v266, 112
  %v295 = vpop.permute.xlu0 %294
  %296 = vrot.lane.b32.xlu0 %v268, 112
  %v297 = vpop.permute.xlu0 %296
  %298 = vrot.lane.b32.xlu0 %v267, 112
  %v299 = vpop.permute.xlu0 %298
  %300 = vrot.lane.b32.xlu0 %v269, 112
  %v301 = vpop.permute.xlu0 %300
  %v302 = vsel %vm155, %v295, %v299
  %v303 = vsel %vm155, %v297, %v301
  %v304 = vsel %vm155, %v299, %v295
  %v305 = vsel %vm155, %v301, %v297
  %v306 = vmul.f32 %v302, %v164
  %v307 = vmul.f32 %v304, %v168
  %v308 = vmul.f32 %v303, %v164
  %v309 = vmul.f32 %v305, %v168
  %v310 = vadd.f32 %v290, %v306
  %v311 = vadd.f32 %v291, %v307
  %v312 = vadd.f32 %v292, %v308
  %v313 = vadd.f32 %v293, %v309
  %v314 = vadd.f32 %v310, 1.6e-19
  %v315 = vadd.f32 %v311, 1.6e-19
  %v316 = vrcp.pop %v314
  %v317 = vrcp.pop %v315
  %v318 = vmul.f32 %v314, %v316
  %v319 = vmul.f32 %v315, %v317
  %v320 = vsub.f32 2.0, %v318
  %v321 = vsub.f32 2.0, %v319
  %v322 = vmul.f32 %v316, %v320
  %v323 = vmul.f32 %v317, %v321
  %v324 = vmul.f32 %v312, %v322
  %v325 = vmul.f32 %v313, %v323
  %326 = vst [vmem:[%s6] sm:$0xff] %v324
  %327 = vst [vmem:[%s6 + $0x8] sm:$0xff] %v325
  %v328 = vmul.f32 %v310, 0.0625
  %v329 = vmul.f32 %v311, 0.0625
  %330 = vst [vmem:[%s7] sm:$0xff] %v328
  %331 = vst [vmem:[%s7 + $0x8] sm:$0xff] %v329
  // Predicated region
  $region26: #{fwd.1} parent=0 // pred_check
    _
  $region27: #{fwd.1} parent=0 // pred_check_branch
    %333 = sbr.rel (0) target = $region29
  $region28: #{fwd.1} parent=0 // pred_region
    _
  $region29: #{fwd.1} parent=0 // pred_fallthru
    _
  // Predicated region
  $region30: #{fwd.1} parent=0 // pred_check
    _
  $region31: #{fwd.1} parent=0 // pred_check_branch
    %335 = sbr.rel (0) target = $region33
  $region32: #{fwd.1} parent=0 // pred_region
    _
  $region33: #{fwd.1} parent=0 // pred_fallthru
    _
  // Predicated region
  $region34: #{fwd.1} parent=0 // pred_check
    _
  $region35: #{fwd.1} parent=0 // pred_check_branch
    %337 = sbr.rel (0) target = $region37
  $region36: #{fwd.1} parent=0 // pred_region
    _
  $region37: #{fwd.1} parent=0 // pred_fallthru
    _
  // Predicated region
  $region38: #{fwd.1} parent=0 // pred_check
    _
  $region39: #{fwd.1} parent=0 // pred_check_branch
    %339 = sbr.rel (0) target = $region41
  $region40: #{fwd.1} parent=0 // pred_region
    _
  $region41: #{fwd.1} parent=0 // pred_fallthru
    _

</llo_original>
